<compile_context>
chip_gen: v6e
topology: v6e:2x2x1
jax: 0.10.0
libtpu: 0.0.40
codegen_flags: <defaults>
</compile_context>

<pallas_src>
import functools
import math

import jax
import jax.numpy as jnp
import numpy as np
from jax.experimental import pallas as pl
from jax.experimental.pallas import tpu as pltpu


def _make_table(dim, half, max_period):
    """(2, dim) f32 table: row 0 = full-width freqs, row 1 = phase (0 | -pi/2)."""
    j = np.arange(half, dtype=np.float64)
    freqs_half = np.exp(-math.log(max_period) * j / float(half)) if half > 0 else j
    freqs = np.zeros((dim,), np.float64)
    phase = np.zeros((dim,), np.float64)
    freqs[:half] = freqs_half
    freqs[half:2 * half] = freqs_half
    phase[half:2 * half] = -math.pi / 2.0          # cos(x - pi/2) == sin(x)
    return np.stack([freqs, phase]).astype(np.float32)


def _timestep_embedding_kernel(t_ref, tab_ref, o_ref, *, dim, half):
    """t_ref: (rows, 1) f32; tab_ref: (2, dim) f32; o_ref: (rows, dim)."""
    t = t_ref[...]                                  # (rows, 1)
    freqs = tab_ref[0:1, :]                         # (1, dim)  cos-half || sin-half
    phase = tab_ref[1:2, :]                         # (1, dim)  0        || -pi/2
    # Lane-dense (rows, dim) intermediate, single EUP cos pass; mul/add are VPU
    # filler under the EUP bottleneck.
    emb = jnp.cos(t * freqs + phase)
    if dim % 2:                                     # static branch: zero the pad lane
        lane = jax.lax.broadcasted_iota(jnp.int32, (1, dim), 1)
        emb = jnp.where(lane < 2 * half, emb, 0.0)
    o_ref[...] = emb.astype(o_ref.dtype)            # unmasked lane-dense store


def timestep_embedding(t, dim, max_period=10000.0, out_dtype=jnp.float32):
    """Pallas forward of Timestep: t of shape (B,) -> (B, dim) embedding."""
    B = int(t.shape[0])
    half = dim // 2
    table = jnp.asarray(_make_table(dim, half, float(max_period)))   # (2, dim) f32
    t_col = t.astype(jnp.float32).reshape(B, 1)

    # Tiling: single VMEM tile for small problems; otherwise a parallel 1-D row
    # grid (row block a multiple of 8) so writeback pipelines under compute.
    single_tile_bytes = 2 << 20                     # ~2 MiB of output
    if B * dim * 4 <= single_tile_bytes:
        block_rows, padded_b = B, B
    else:
        block_rows = 1024
        padded_b = int(pl.cdiv(B, block_rows)) * block_rows
        if padded_b != B:
            t_col = jnp.pad(t_col, ((0, padded_b - B), (0, 0)))

    kernel = functools.partial(_timestep_embedding_kernel, dim=dim, half=half)

    out = pl.pallas_call(
        kernel,
        out_shape=jax.ShapeDtypeStruct((padded_b, dim), out_dtype),
        grid=(padded_b // block_rows,),
        in_specs=[
            pl.BlockSpec((block_rows, 1), lambda i: (i, 0)),   # timesteps (rows on sublanes)
            pl.BlockSpec((2, dim), lambda i: (0, 0)),          # freqs/phase table (resident)
        ],
        out_specs=pl.BlockSpec((block_rows, dim), lambda i: (i, 0)),
        compiler_params=pltpu.CompilerParams(
            dimension_semantics=("parallel",)),                # shards rows over v7x's 2 TCs
    )(t_col, table)

    return out[:B] if padded_b != B else out


class Timestep:
    """JAX/Pallas mirror of the PyTorch Timestep module."""

    def __init__(self, dim):
        self.dim = dim

    def __call__(self, t):
        return timestep_embedding(t, self.dim)


def ref_timestep_embedding(t, dim, max_period=10000.0):
    """Pure-JAX mirror of the PyTorch timestep_embedding (repeat_only=False)."""
    half = dim // 2
    freqs = jnp.exp(-math.log(max_period)
                    * jnp.arange(half, dtype=jnp.float32) / half)
    args = t.astype(jnp.float32)[:, None] * freqs[None]
    emb = jnp.concatenate([jnp.cos(args), jnp.sin(args)], axis=-1)
    if dim % 2:
        emb = jnp.concatenate([emb, jnp.zeros_like(emb[:, :1])], axis=-1)
    return emb


if __name__ == "__main__":
    B, dim = 2, 128
    key = jax.random.PRNGKey(0)
    # Diffusion-style integer timesteps in [0, 1000).
    t = jax.random.randint(key, (B,), 0, 1000).astype(jnp.float32)

    mod = Timestep(dim)
    out = jax.block_until_ready(mod(t))

    ref = ref_timestep_embedding(t, dim)
    # Tolerance note: the kernel uses host-precomputed (f64 -> f32) freqs and the
    # cos-with-phase identity, while the reference computes freqs with on-device
    # f32 exp and a separate sin.  Ulp-level freq differences are amplified by
    # t ~ 1e3 in the trig argument, so the achievable agreement is a few 1e-4.
    np.testing.assert_allclose(np.asarray(out), np.asarray(ref),
                               atol=1e-3, rtol=1e-3)
    print("KERNEL_OK")
</pallas_src>

<mosaic_0001>
module attributes {stable_mosaic.version = 11 : i64} {
  func.func @_timestep_embedding_kernel(%arg0: i32, %arg1: memref<2x1xf32, #tpu.memory_space<vmem>>, %arg2: memref<2x128xf32, #tpu.memory_space<vmem>>, %arg3: memref<2x128xf32, #tpu.memory_space<vmem>>) attributes {dimension_semantics = [#tpu.dimension_semantics<parallel>], iteration_bounds = array<i64: 1>, scalar_prefetch = 0 : i64, scratch_operands = 0 : i64, tpu.core_type = #tpu.core_type<tc>, window_params = [{transform_indices = @transform_0, window_bounds = array<i64: 2, 1>}, {pipeline_mode = #tpu.pipeline_mode<synchronous>, transform_indices = @transform_1, window_bounds = array<i64: 2, 128>}, {transform_indices = @transform_2, window_bounds = array<i64: 2, 128>}]} {
    %c0 = arith.constant 0 : index
    %c0_0 = arith.constant 0 : index
    %0 = vector.load %arg1[%c0, %c0_0] : memref<2x1xf32, #tpu.memory_space<vmem>>, vector<2x1xf32>
    %c0_1 = arith.constant 0 : index
    %c0_2 = arith.constant 0 : index
    %1 = vector.load %arg2[%c0_1, %c0_2] : memref<2x128xf32, #tpu.memory_space<vmem>>, vector<1x128xf32>
    %c1 = arith.constant 1 : index
    %c0_3 = arith.constant 0 : index
    %2 = vector.load %arg2[%c1, %c0_3] : memref<2x128xf32, #tpu.memory_space<vmem>>, vector<1x128xf32>
    %3 = vector.broadcast %0 : vector<2x1xf32> to vector<2x128xf32>
    %4 = vector.broadcast %1 : vector<1x128xf32> to vector<2x128xf32>
    %5 = arith.mulf %3, %4 : vector<2x128xf32>
    %6 = vector.broadcast %2 : vector<1x128xf32> to vector<2x128xf32>
    %7 = arith.addf %5, %6 : vector<2x128xf32>
    %8 = math.cos %7 : vector<2x128xf32>
    %c0_4 = arith.constant 0 : index
    %c0_5 = arith.constant 0 : index
    %9 = vector.load %arg3[%c0_4, %c0_5] : memref<2x128xf32, #tpu.memory_space<vmem>>, vector<2x128xf32>
    tpu.vector_store %arg3[%c0_4, %c0_5], %8 {strides = array<i32>} : memref<2x128xf32, #tpu.memory_space<vmem>>, vector<2x128xf32>,
    return
  }
  func.func @transform_0(%arg0: i32) -> (i32, i32) {
    %c0_i32 = arith.constant 0 : i32
    %c0_i32_0 = arith.constant 0 : i32
    return %arg0, %c0_i32 : i32, i32
  }
  func.func @transform_1(%arg0: i32) -> (i32, i32) {
    %c0_i32 = arith.constant 0 : i32
    %c0_i32_0 = arith.constant 0 : i32
    %c0_i32_1 = arith.constant 0 : i32
    return %c0_i32, %c0_i32_0 : i32, i32
  }
  func.func @transform_2(%arg0: i32) -> (i32, i32) {
    %c0_i32 = arith.constant 0 : i32
    %c0_i32_0 = arith.constant 0 : i32
    return %arg0, %c0_i32 : i32, i32
  }
}

</mosaic_0001>

<llo_original>
// kernel: tpu_custom_call.1
$region0: #{tpu_custom_call.1}
  #allocation0 [shape = 'u32[]', space=smem, size = 0x4, offset = 0x4, fixed_abs, tag = 'smem constant byte address 0x4 - core index']
  #allocation1 [shape = 'u32[144,128]{1,0:T(1,128)}', space=vmem, size = 0x12000, scoped, tag = 'internal scratch']
  %s0 = inlined_call_operand.vmem [shape: f32[2,1], index: 0, kind: input, shape index: {}]
  %s1 = inlined_call_operand.vmem [shape: f32[2,128], index: 1, kind: input, shape index: {}]
  %s2 = inlined_call_operand.hbm [shape: f32[2,128], index: 2, kind: output, shape index: {}]
  %s3 = sld [smem:[#allocation0]]
  $region18: #{tpu_custom_call.1} parent=0
    _
  %s5 = ssub.s32 1, %s3
  %s6 = scalar_select 0, %s5, %s3
  $region1: #{tpu_custom_call.1} parent=0
    #allocation2 [shape = 'u8[1024]{0}', space=vmem, size = 0x400, scoped, tag = 'output window, operand 0, single buffered']
    #allocation3 [shape = 's32[1]{0}', space=sflag, size = 0x4, scoped, tag = 'scoped memory for tpu_custom_call.1']
    %7 = vsyncpa [#allocation3], 0
    // Predicated region
    $region2: #{tpu_custom_call.1} parent=1 // pred_check
      _
    $region3: #{tpu_custom_call.1} parent=1 // pred_check_branch
      %9 = sbr.rel (0) target = $region5
    $region4: #{tpu_custom_call.1} parent=1 // pred_region
      _
    $region5: #{tpu_custom_call.1} parent=1 // pred_fallthru
      _
    // Predicated region
    $region6: #{tpu_custom_call.1} parent=1 // pred_check
      _
    $region7: #{tpu_custom_call.1} parent=1 // pred_check_branch
      %11 = sbr.rel (0) target = $region9
    $region8: #{tpu_custom_call.1} parent=1 // pred_region
      _
    $region9: #{tpu_custom_call.1} parent=1 // pred_fallthru
      _
    %v12 = vld [vmem:[%s0] sm:$0x3]
    %v13 = vld [vmem:[%s1] sm:$0x1]
    %v14 = vld [vmem:[%s1 + $0x1] sm:$0x1]
    %16 = vset.pattern.permute.xlu0 0
    %17 = vperm.xlu0 %16, %v12
    %v18 = vpop.permute.xlu0 %17
    %v20 = vlaneseq
    %v21 = vshrl.u32 %v20, 7
    %v22 = vsub.s32 0, %v21
    %v23 = vrot.slane %v13, %v22
    %v24 = vmul.f32 %v18, %v23
    %v25 = vlaneseq
    %v26 = vshrl.u32 %v25, 7
    %v27 = vsub.s32 0, %v26
    %v28 = vrot.slane %v14, %v27
    %v29 = vadd.f32 %v24, %v28
    %v30 = vand.u32 2147483647, %v29
    %vm31 = vcmp.le.f32.partialorder %v30, 0.7853982
    %vm32 = vcmp.lt.s32.totalorder %v29, 0
    %v33 = vand.u32 %v29, 2139095040
    %v34 = vshrl.u32 %v33, 23
    %v35 = vsub.s32 %v34, 127
    %v36 = vand.u32 2147483647, %v29
    %v37 = vand.u32 %v36, 8388607
    %v38 = vor.u32 %v37, 8388608
    %v39 = vsub.s32 0, %v38
    %v40 = vadd.s32 %v35, 1
    %vm41 = vcmp.gt.s32.totalorder %v40, 0
    %v42 = vsel %vm41, %v40, 0
    %v43 = vshrl.u32 %v42, 5
    %v44 = vand.u32 %v42, 31
    %v45 = vsub.s32 32, %v44
    %v46 = vshrl.u32 683565275, %v45
    %v47 = vshll.u32 683565275, %v44
    %v48 = vshrl.u32 2475754826, %v45
    %v49 = vor.u32 %v47, %v48
    %v50 = vshll.u32 2475754826, %v44
    %v51 = vshrl.u32 2131351028, %v45
    %v52 = vor.u32 %v50, %v51
    %v53 = vshll.u32 2131351028, %v44
    %v54 = vshrl.u32 2102212464, %v45
    %v55 = vor.u32 %v53, %v54
    %v56 = vshll.u32 2102212464, %v44
    %v57 = vshrl.u32 920167782, %v45
    %v58 = vor.u32 %v56, %v57
    %v59 = vshll.u32 920167782, %v44
    %v60 = vshrl.u32 1326507024, %v45
    %v61 = vor.u32 %v59, %v60
    %vm62 = vcmp.lt.s32.totalorder %v43, 1
    %vm63 = vcmp.lt.s32.totalorder %v43, 2
    %vm64 = vcmp.lt.s32.totalorder %v43, 3
    %vm65 = vcmp.lt.s32.totalorder %v43, 4
    %v66 = vsel %vm62, %v46, %v49
    %v67 = vsel %vm65, %v55, 2102212464
    %v68 = vsel %vm64, %v52, %v67
    %v69 = vsel %vm63, %v66, %v68
    %v70 = vsel %vm62, %v49, %v52
    %v71 = vsel %vm65, %v58, 920167782
    %v72 = vsel %vm64, %v55, %v71
    %v73 = vsel %vm63, %v70, %v72
    %v74 = vsel %vm62, %v52, %v55
    %v75 = vsel %vm65, %v61, 1326507024
    %v76 = vsel %vm64, %v58, %v75
    %v77 = vsel %vm63, %v74, %v76
    %v78 = vshll.u32 %v38, 8
    %v79 = vmul.u32.u64.compose %v78, %v77
    %v80 = vextract.low.u32 %v79
    %v81 = vextract.high.u32 %v79
    %v82 = vmul.u32.u64.compose %v78, %v73
    %v83 = vextract.low.u32 %v82
    %v84 = vextract.high.u32 %v82
    %v85 = vmul.u32 %v78, %v69
    %v86 = vadd.s32 %v81, %v83
    %vm87 = vc.u32 %v81, %v83
    %v88 = vadd.s32 %v84, 1
    %v89 = vsel %vm87, %v88, %v84
    %v90 = vadd.s32 %v85, %v89
    %v91 = vadd.s32 %v90, 536870912
    %v92 = vshrl.u32 %v91, 30
    %v93 = vshll.u32 %v92, 30
    %v94 = vsub.s32 %v90, %v93
    %vm95 = vcmp.lt.s32.totalorder %v94, 0
    %v96 = vsub.s32 0, %v94
    %v97 = vsel %vm95, %v96, %v94
    %v98 = vclz %v97
    %v99 = vsub.s32 %v98, 2
    %vm100 = vcmp.gt.s32.totalorder 0, %v99
    %v101 = vsel %vm100, 0, %v99
    %v102 = vsub.s32 32, %v101
    %v103 = vshll.u32 %v94, %v101
    %v104 = vshrl.u32 %v86, %v102
    %v105 = vor.u32 %v103, %v104
    %v106 = vsub.s32 4294967266, %v101
    %v107 = vadd.s32 %v106, 127
    %v108 = vshll.u32 %v107, 23
    %v109 = vor.u32 4788187, %v108
    %v110 = vand.u32 2147483647, %v109
    %v112 = vcvt.s32.f32 %v105
    %v113 = vmul.f32 %v112, %v110
    %v114 = vxor.u32 %v113, 2147483648
    %v115 = vsel %vm32, %v114, %v113
    %v116 = vsub.s32 4, %v92
    %v117 = vsel %vm32, %v116, %v92
    %v118 = vsel %vm31, %v29, %v115
    %v119 = vsel %vm31, 0, %v117
    %v120 = vcosq.f32.pop %v118
    %v121 = vsinq.f32.pop %v118
    %vm122 = vweird.f32 %v29
    %v123 = vand.u32 %v119, 3
    %vm124 = vcmp.lt.s32.totalorder %v123, 2
    %vm125 = vcmp.eq.s32.totalorder %v123, 0
    %v126 = vxor.u32 %v121, 2147483648
    %v127 = vsel %vm125, %v120, %v126
    %vm128 = vcmp.eq.s32.totalorder %v123, 2
    %v129 = vxor.u32 %v120, 2147483648
    %v130 = vsel %vm128, %v129, %v121
    %v131 = vsel %vm124, %v127, %v130
    %v132 = vsel %vm122, nan, %v131
    %133 = vst [vmem:[#allocation2] sm:$0x3] %v132
    // Predicated region
    $region10: #{tpu_custom_call.1} parent=1 // pred_check
      _
    $region11: #{tpu_custom_call.1} parent=1 // pred_check_branch
      %135 = sbr.rel (0) target = $region13
    $region12: #{tpu_custom_call.1} parent=1 // pred_region
      %s137 = ssub.s32 32, 32
      %138 = vsyncadd [#allocation3], %s137
      %s140 = sshll.u32 [#allocation2], 4
      %s141 = int_to_ptr.vmem [resolvable:$true] %s140
      %143 = dma.vmem_to_hbm [thread:$0]  %s141, 32, %s2, [#allocation3]
    $region13: #{tpu_custom_call.1} parent=1 // pred_fallthru
      _
    // Predicated region
    $region14: #{tpu_custom_call.1} parent=1 // pred_check
      _
    $region15: #{tpu_custom_call.1} parent=1 // pred_check_branch
      %145 = sbr.rel (0) target = $region17
    $region16: #{tpu_custom_call.1} parent=1 // pred_region
      %146 = dma.done [#allocation3], 32
    $region17: #{tpu_custom_call.1} parent=1 // pred_fallthru
      _
    %147 = vsyncpa [#allocation3], 1

</llo_original>
